<compile_context>
chip_gen: v7x
topology: tpu7x:2x2x1
jax: 0.10.0
libtpu: 0.0.40
codegen_flags: <defaults>
</compile_context>

<pallas_src>
import math

import jax
import jax.numpy as jnp
from jax.experimental import pallas as pl
from jax.experimental.pallas import tpu as pltpu

# ---- model config (depth = 2, act_fn = Tanh) ------------------------------
LATENT_DIM = 8            # decoder input dim (z)
HIDDEN_DIM = 32           # last hidden layer
INPUT_DIM = 16            # decoder predicts 2 * INPUT_DIM features (bias, logvar)
BATCH = 8                 # example batch (multiple of 8 = sublane width)

H2 = HIDDEN_DIM // 2                       # first hidden layer (hidden // 2**(depth-1))
LANES = max(H2, HIDDEN_DIM, INPUT_DIM)     # lane width of the packed param buffer (=32)

# ---- packed-parameter row layout (weights stored pre-transposed as (in, out)) ----
OFF_W1 = 0                                 # rows [0,  8)  : (LATENT_DIM, H2)
OFF_W2 = OFF_W1 + LATENT_DIM               # rows [8, 24)  : (H2, HIDDEN_DIM)
OFF_W3L = OFF_W2 + H2                      # rows [24,56)  : (HIDDEN_DIM, INPUT_DIM) loc head
OFF_W3V = OFF_W3L + HIDDEN_DIM             # rows [56,88)  : (HIDDEN_DIM, INPUT_DIM) logvar head
OFF_B = OFF_W3V + HIDDEN_DIM               # rows [88,92)  : b1, b2, b3_loc, b3_logvar
PACK_ROWS = ((OFF_B + 4 + 7) // 8) * 8     # pad row count to a multiple of 8 (=96)


def gaussian_decoder_kernel(z_ref, p_ref, loc_ref, var_ref):
    """One batch-tile of the decoder MLP; params come in as a single packed buffer."""
    z = z_ref[...]                                                    # (Bt, L)

    # static carves of the packed parameter slab (8-aligned sublane offsets)
    w1 = p_ref[OFF_W1:OFF_W1 + LATENT_DIM, :H2]                       # (L,  H2)
    w2 = p_ref[OFF_W2:OFF_W2 + H2, :HIDDEN_DIM]                       # (H2, H)
    w3_loc = p_ref[OFF_W3L:OFF_W3L + HIDDEN_DIM, :INPUT_DIM]          # (H,  D)
    w3_lv = p_ref[OFF_W3V:OFF_W3V + HIDDEN_DIM, :INPUT_DIM]           # (H,  D)
    b1 = p_ref[OFF_B + 0:OFF_B + 1, :H2]                              # (1,  H2)
    b2 = p_ref[OFF_B + 1:OFF_B + 2, :HIDDEN_DIM]                      # (1,  H)
    b3_loc = p_ref[OFF_B + 2:OFF_B + 3, :INPUT_DIM]                   # (1,  D)
    b3_lv = p_ref[OFF_B + 3:OFF_B + 4, :INPUT_DIM]                    # (1,  D)

    h1 = jnp.tanh(jnp.dot(z, w1, preferred_element_type=jnp.float32) + b1)     # (Bt, H2)
    h2 = jnp.tanh(jnp.dot(h1, w2, preferred_element_type=jnp.float32) + b2)    # (Bt, H)

    loc = jnp.dot(h2, w3_loc, preferred_element_type=jnp.float32) + b3_loc     # (Bt, D)
    logvar = jnp.dot(h2, w3_lv, preferred_element_type=jnp.float32) + b3_lv    # (Bt, D)

    loc_ref[...] = loc.astype(loc_ref.dtype)
    # NOTE: matches the PyTorch reference exactly (scale = exp(logvar), not exp(0.5*logvar));
    # exp may overflow for large logits, same as the reference.
    var_ref[...] = jnp.exp(logvar).astype(var_ref.dtype)


def pack_params(params):
    """Pack PyTorch-layout params (W:(out,in), b:(out,)) into one (PACK_ROWS, LANES) slab.

    Weights are transposed to (in, out) and the output layer is split into its
    loc / logvar halves so the kernel never transposes or lane-slices.
    """
    w1, b1, w2, b2, w3, b3 = params
    p = jnp.zeros((PACK_ROWS, LANES), jnp.float32)
    p = p.at[OFF_W1:OFF_W1 + LATENT_DIM, :H2].set(w1.T)
    p = p.at[OFF_W2:OFF_W2 + H2, :HIDDEN_DIM].set(w2.T)
    p = p.at[OFF_W3L:OFF_W3L + HIDDEN_DIM, :INPUT_DIM].set(w3[:INPUT_DIM, :].T)
    p = p.at[OFF_W3V:OFF_W3V + HIDDEN_DIM, :INPUT_DIM].set(w3[INPUT_DIM:, :].T)
    p = p.at[OFF_B + 0, :H2].set(b1)
    p = p.at[OFF_B + 1, :HIDDEN_DIM].set(b2)
    p = p.at[OFF_B + 2, :INPUT_DIM].set(b3[:INPUT_DIM])
    p = p.at[OFF_B + 3, :INPUT_DIM].set(b3[INPUT_DIM:])
    return p


def gaussian_decoder(z, packed_params):
    """Returns (loc, scale_tril) of the decoder's MultivariateNormal."""
    batch = z.shape[0]
    # Pad ragged batches up to the sublane width so any batch size is legal.
    padded_batch = ((batch + 7) // 8) * 8
    if padded_batch != batch:
        z = jnp.pad(z, ((0, padded_batch - batch), (0, 0)))

    block_b = math.gcd(padded_batch, 128)    # amortize the call over up to 128 rows/step
    grid = (padded_batch // block_b,)

    flops = 2 * padded_batch * (LATENT_DIM * H2 + H2 * HIDDEN_DIM
                                + HIDDEN_DIM * 2 * INPUT_DIM)
    transcendentals = padded_batch * (H2 + HIDDEN_DIM + INPUT_DIM)   # tanh, tanh, exp
    bytes_accessed = 4 * (padded_batch * LATENT_DIM + PACK_ROWS * LANES
                          + 2 * padded_batch * INPUT_DIM)

    loc, var = pl.pallas_call(
        gaussian_decoder_kernel,
        out_shape=(
            jax.ShapeDtypeStruct((padded_batch, INPUT_DIM), jnp.float32),   # loc
            jax.ShapeDtypeStruct((padded_batch, INPUT_DIM), jnp.float32),   # var (diag)
        ),
        grid=grid,
        in_specs=[
            pl.BlockSpec((block_b, LATENT_DIM), lambda i: (i, 0)),   # z tile
            pl.BlockSpec((PACK_ROWS, LANES), lambda i: (0, 0)),      # packed params (resident)
        ],
        out_specs=(
            pl.BlockSpec((block_b, INPUT_DIM), lambda i: (i, 0)),
            pl.BlockSpec((block_b, INPUT_DIM), lambda i: (i, 0)),
        ),
        compiler_params=pltpu.CompilerParams(
            dimension_semantics=("parallel",)),
        cost_estimate=pl.CostEstimate(
            flops=flops,
            transcendentals=transcendentals,
            bytes_accessed=bytes_accessed),
    )(z, packed_params)

    if padded_batch != batch:
        loc = loc[:batch]
        var = var[:batch]

    # diag_embed is pure layout work; build it outside the kernel (XLA fuses it).
    scale_tril = var[:, :, None] * jnp.eye(INPUT_DIM, dtype=var.dtype)[None]
    return loc, scale_tril


def init_params(key):
    """Deterministic init with PyTorch Linear shapes: W (out, in), b (out,)."""
    def linear(k, fan_in, fan_out):
        k1, k2 = jax.random.split(k)
        bound = 1.0 / (fan_in ** 0.5)
        w = jax.random.uniform(k1, (fan_out, fan_in), jnp.float32, -bound, bound)
        b = jax.random.uniform(k2, (fan_out,), jnp.float32, -bound, bound)
        return w, b

    k1, k2, k3 = jax.random.split(key, 3)
    w1, b1 = linear(k1, LATENT_DIM, H2)                   # 8  -> 16
    w2, b2 = linear(k2, H2, HIDDEN_DIM)                   # 16 -> 32
    w3, b3 = linear(k3, HIDDEN_DIM, 2 * INPUT_DIM)        # 32 -> 32
    return (w1, b1, w2, b2, w3, b3)


def reference(z, params):
    """Pure-JAX reference with the original (unpacked, PyTorch-layout) params."""
    w1, b1, w2, b2, w3, b3 = params
    h = jnp.tanh(z @ w1.T + b1)
    h = jnp.tanh(h @ w2.T + b2)
    out = h @ w3.T + b3
    bias, logvar = out[:, :INPUT_DIM], out[:, INPUT_DIM:]
    var = jnp.exp(logvar)
    scale_tril = var[:, :, None] * jnp.eye(INPUT_DIM, dtype=var.dtype)[None]
    return bias, scale_tril


if __name__ == "__main__":
    key = jax.random.PRNGKey(0)
    kz, kp = jax.random.split(key)
    z = jax.random.normal(kz, (BATCH, LATENT_DIM), jnp.float32)
    params = init_params(kp)
    packed = pack_params(params)

    loc, scale_tril = jax.jit(gaussian_decoder)(z, packed)
    loc = jax.block_until_ready(loc)
    scale_tril = jax.block_until_ready(scale_tril)

    loc_ref, scale_ref = reference(z, params)
    assert loc.shape == (BATCH, INPUT_DIM)
    assert scale_tril.shape == (BATCH, INPUT_DIM, INPUT_DIM)
    assert jnp.allclose(loc, loc_ref, atol=1e-5, rtol=1e-5)
    assert jnp.allclose(scale_tril, scale_ref, atol=1e-5, rtol=1e-5)

    print("KERNEL_OK")
</pallas_src>

<mosaic_0001>
module attributes {stable_mosaic.version = 11 : i64} {
  func.func @gaussian_decoder_kernel(%arg0: i32, %arg1: memref<8x8xf32, #tpu.memory_space<vmem>>, %arg2: memref<96x32xf32, #tpu.memory_space<vmem>>, %arg3: memref<8x16xf32, #tpu.memory_space<vmem>>, %arg4: memref<8x16xf32, #tpu.memory_space<vmem>>) attributes {dimension_semantics = [#tpu.dimension_semantics<parallel>], iteration_bounds = array<i64: 1>, scalar_prefetch = 0 : i64, scratch_operands = 0 : i64, tpu.core_type = #tpu.core_type<tc>, window_params = [{transform_indices = @transform_0, window_bounds = array<i64: 8, 8>}, {pipeline_mode = #tpu.pipeline_mode<synchronous>, transform_indices = @transform_1, window_bounds = array<i64: 96, 32>}, {transform_indices = @transform_2, window_bounds = array<i64: 8, 16>}, {transform_indices = @transform_3, window_bounds = array<i64: 8, 16>}]} {
    %c0 = arith.constant 0 : index
    %c0_0 = arith.constant 0 : index
    %0 = vector.load %arg1[%c0, %c0_0] : memref<8x8xf32, #tpu.memory_space<vmem>>, vector<8x8xf32>
    %c0_1 = arith.constant 0 : index
    %c0_2 = arith.constant 0 : index
    %1 = vector.load %arg2[%c0_1, %c0_2] : memref<96x32xf32, #tpu.memory_space<vmem>>, vector<8x16xf32>
    %c8 = arith.constant 8 : index
    %c0_3 = arith.constant 0 : index
    %2 = vector.load %arg2[%c8, %c0_3] : memref<96x32xf32, #tpu.memory_space<vmem>>, vector<16x32xf32>
    %c24 = arith.constant 24 : index
    %c0_4 = arith.constant 0 : index
    %3 = vector.load %arg2[%c24, %c0_4] : memref<96x32xf32, #tpu.memory_space<vmem>>, vector<32x16xf32>
    %c56 = arith.constant 56 : index
    %c0_5 = arith.constant 0 : index
    %4 = vector.load %arg2[%c56, %c0_5] : memref<96x32xf32, #tpu.memory_space<vmem>>, vector<32x16xf32>
    %c88 = arith.constant 88 : index
    %c0_6 = arith.constant 0 : index
    %5 = vector.load %arg2[%c88, %c0_6] : memref<96x32xf32, #tpu.memory_space<vmem>>, vector<1x16xf32>
    %c89 = arith.constant 89 : index
    %c0_7 = arith.constant 0 : index
    %6 = vector.load %arg2[%c89, %c0_7] : memref<96x32xf32, #tpu.memory_space<vmem>>, vector<1x32xf32>
    %c90 = arith.constant 90 : index
    %c0_8 = arith.constant 0 : index
    %7 = vector.load %arg2[%c90, %c0_8] : memref<96x32xf32, #tpu.memory_space<vmem>>, vector<1x16xf32>
    %c91 = arith.constant 91 : index
    %c0_9 = arith.constant 0 : index
    %8 = vector.load %arg2[%c91, %c0_9] : memref<96x32xf32, #tpu.memory_space<vmem>>, vector<1x16xf32>
    %cst = arith.constant dense<0.000000e+00> : vector<8x16xf32>
    %9 = tpu.matmul %0, %1, %cst {dimension_numbers = #tpu.dot_dimension_numbers<[1], [0], [0], [1], [0, 0, 1, 1], [], []>} : vector<8x8xf32>, vector<8x16xf32>, vector<8x16xf32> -> vector<8x16xf32>
    %10 = vector.broadcast %5 : vector<1x16xf32> to vector<8x16xf32>
    %11 = arith.addf %9, %10 : vector<8x16xf32>
    %12 = math.tanh %11 : vector<8x16xf32>
    %cst_10 = arith.constant dense<0.000000e+00> : vector<8x32xf32>
    %13 = tpu.matmul %12, %2, %cst_10 {dimension_numbers = #tpu.dot_dimension_numbers<[1], [0], [0], [1], [0, 0, 1, 1], [], []>} : vector<8x16xf32>, vector<16x32xf32>, vector<8x32xf32> -> vector<8x32xf32>
    %14 = vector.broadcast %6 : vector<1x32xf32> to vector<8x32xf32>
    %15 = arith.addf %13, %14 : vector<8x32xf32>
    %16 = math.tanh %15 : vector<8x32xf32>
    %cst_11 = arith.constant dense<0.000000e+00> : vector<8x16xf32>
    %17 = tpu.matmul %16, %3, %cst_11 {dimension_numbers = #tpu.dot_dimension_numbers<[1], [0], [0], [1], [0, 0, 1, 1], [], []>} : vector<8x32xf32>, vector<32x16xf32>, vector<8x16xf32> -> vector<8x16xf32>
    %18 = vector.broadcast %7 : vector<1x16xf32> to vector<8x16xf32>
    %19 = arith.addf %17, %18 : vector<8x16xf32>
    %cst_12 = arith.constant dense<0.000000e+00> : vector<8x16xf32>
    %20 = tpu.matmul %16, %4, %cst_12 {dimension_numbers = #tpu.dot_dimension_numbers<[1], [0], [0], [1], [0, 0, 1, 1], [], []>} : vector<8x32xf32>, vector<32x16xf32>, vector<8x16xf32> -> vector<8x16xf32>
    %21 = vector.broadcast %8 : vector<1x16xf32> to vector<8x16xf32>
    %22 = arith.addf %20, %21 : vector<8x16xf32>
    %c0_13 = arith.constant 0 : index
    %c0_14 = arith.constant 0 : index
    %23 = vector.load %arg3[%c0_13, %c0_14] : memref<8x16xf32, #tpu.memory_space<vmem>>, vector<8x16xf32>
    tpu.vector_store %arg3[%c0_13, %c0_14], %19 {strides = array<i32>} : memref<8x16xf32, #tpu.memory_space<vmem>>, vector<8x16xf32>,
    %24 = math.exp %22 : vector<8x16xf32>
    %c0_15 = arith.constant 0 : index
    %c0_16 = arith.constant 0 : index
    %25 = vector.load %arg4[%c0_15, %c0_16] : memref<8x16xf32, #tpu.memory_space<vmem>>, vector<8x16xf32>
    tpu.vector_store %arg4[%c0_15, %c0_16], %24 {strides = array<i32>} : memref<8x16xf32, #tpu.memory_space<vmem>>, vector<8x16xf32>,
    return
  }
  func.func @transform_0(%arg0: i32) -> (i32, i32) {
    %c0_i32 = arith.constant 0 : i32
    %c0_i32_0 = arith.constant 0 : i32
    return %arg0, %c0_i32 : i32, i32
  }
  func.func @transform_1(%arg0: i32) -> (i32, i32) {
    %c0_i32 = arith.constant 0 : i32
    %c0_i32_0 = arith.constant 0 : i32
    %c0_i32_1 = arith.constant 0 : i32
    return %c0_i32, %c0_i32_0 : i32, i32
  }
  func.func @transform_2(%arg0: i32) -> (i32, i32) {
    %c0_i32 = arith.constant 0 : i32
    %c0_i32_0 = arith.constant 0 : i32
    return %arg0, %c0_i32 : i32, i32
  }
  func.func @transform_3(%arg0: i32) -> (i32, i32) {
    %c0_i32 = arith.constant 0 : i32
    %c0_i32_0 = arith.constant 0 : i32
    return %arg0, %c0_i32 : i32, i32
  }
}

</mosaic_0001>

<llo_original>
// kernel: gaussian_decoder.1
$region0: #{gaussian_decoder.1}
  #allocation0 [shape = 'u32[]', space=smem, size = 0x4, offset = 0x4, fixed_abs, tag = 'smem constant byte address 0x4 - core index']
  #allocation1 [shape = 'u32[144,128]{1,0:T(1,128)}', space=vmem, size = 0x12000, scoped, tag = 'internal scratch']
  %s0 = inlined_call_operand.vmem [shape: f32[8,8], index: 0, kind: input, shape index: {}]
  %s1 = inlined_call_operand.vmem [shape: f32[96,32], index: 1, kind: input, shape index: {}]
  %s2 = inlined_call_operand.hbm [shape: f32[8,16], index: 2, kind: output, shape index: {0}]
  %s3 = inlined_call_operand.vmem [shape: f32[8,16], index: 3, kind: output, shape index: {1}]
  %4 = xla_tuple %s2, %s3
  %s5 = sld [smem:[#allocation0]]
  $region26: #{gaussian_decoder.1} parent=0
    _
  %s7 = ssub.s32 1, %s5
  %s8 = scalar_select 0, %s7, %s5
  $region1: #{gaussian_decoder.1} parent=0
    #allocation2 [shape = 'u8[4096]{0}', space=vmem, size = 0x1000, scoped, tag = 'output window, operand 0, single buffered']
    #allocation3 [shape = 's32[1]{0}', space=sflag, size = 0x4, scoped, tag = 'scoped memory for gaussian_decoder.1']
    %9 = vsyncpa [#allocation3], 0
    // Predicated region
    $region2: #{gaussian_decoder.1} parent=1 // pred_check
      _
    $region3: #{gaussian_decoder.1} parent=1 // pred_check_branch
      %11 = sbr.rel (0) target = $region5
    $region4: #{gaussian_decoder.1} parent=1 // pred_region
      _
    $region5: #{gaussian_decoder.1} parent=1 // pred_fallthru
      _
    // Predicated region
    $region6: #{gaussian_decoder.1} parent=1 // pred_check
      _
    $region7: #{gaussian_decoder.1} parent=1 // pred_check_branch
      %13 = sbr.rel (0) target = $region9
    $region8: #{gaussian_decoder.1} parent=1 // pred_region
      _
    $region9: #{gaussian_decoder.1} parent=1 // pred_fallthru
      _
    %v14 = vld [vmem:[%s0] sm:$0xff]
    %v15 = vld [vmem:[%s1] sm:$0xff]
    %v16 = vld [vmem:[%s1 + $0x8] sm:$0xff]
    %v17 = vld [vmem:[%s1 + $0x10] sm:$0xff]
    %v18 = vld [vmem:[%s1 + $0x18] sm:$0xff]
    %v19 = vld [vmem:[%s1 + $0x20] sm:$0xff]
    %v20 = vld [vmem:[%s1 + $0x28] sm:$0xff]
    %v21 = vld [vmem:[%s1 + $0x30] sm:$0xff]
    %v22 = vld [vmem:[%s1 + $0x38] sm:$0xff]
    %v23 = vld [vmem:[%s1 + $0x40] sm:$0xff]
    %v24 = vld [vmem:[%s1 + $0x48] sm:$0xff]
    %v25 = vld [vmem:[%s1 + $0x50] sm:$0xff]
    %v26 = vld [vmem:[%s1 + $0x58] sm:$0x1]
    %v27 = vld [vmem:[%s1 + $0x59] sm:$0x1]
    %v28 = vld [vmem:[%s1 + $0x5a] sm:$0x1]
    %v29 = vld [vmem:[%s1 + $0x5b] sm:$0x1]
    %v30 = vlaneseq
    %v31 = vshrl.u32 %v30, 7
    %v32 = vsub.s32 0, %v31
    %v33 = vrot.slane %v26, %v32
    %vm34 = vcmask 64512
    %v36 = vsel %vm34, %v14, 0
    %38 = vmatprep.subr.mxu0 0.0
    %39 = vmatpush1.msra.mxu0 %v15
    %40 = vmatprep.subr.mxu0 0.0
    %41 = vmatpush1.msra.mxu0 0.0
    %42 = vmatprep.subr.mxu0 0.0
    %43 = vmatpush1.msra.mxu0 0.0
    %44 = vmatprep.subr.mxu0 0.0
    %45 = vmatpush1.msra.mxu0 0.0
    %46 = vmatprep.subr.mxu0 0.0
    %47 = vmatpush1.msra.mxu0 0.0
    %48 = vmatprep.subr.mxu0 0.0
    %49 = vmatpush1.msra.mxu0 0.0
    %50 = vmatprep.subr.mxu0 0.0
    %51 = vmatpush1.msra.mxu0 0.0
    %52 = vmatprep.subr.mxu0 0.0
    %53 = vmatpush1.msra.mxu0 0.0
    %54 = vmatprep.subr.mxu0 0.0
    %55 = vmatpush1.msra.mxu0 0.0
    %56 = vmatprep.subr.mxu0 0.0
    %57 = vmatpush1.msra.mxu0 0.0
    %58 = vmatprep.subr.mxu0 0.0
    %59 = vmatpush1.msra.mxu0 0.0
    %60 = vmatprep.subr.mxu0 0.0
    %61 = vmatpush1.msra.mxu0 0.0
    %62 = vmatprep.subr.mxu0 0.0
    %63 = vmatpush1.msra.mxu0 0.0
    %64 = vmatprep.subr.mxu0 0.0
    %65 = vmatpush1.msra.mxu0 0.0
    %66 = vmatprep.subr.mxu0 0.0
    %67 = vmatpush1.msra.mxu0 0.0
    %68 = vmatprep.subr.mxu0 0.0
    %69 = vmatpush1.msra.mxu0 0.0
    %70 = vmatprep.subr.mxu0 0.0
    %71 = vmatpush1.msra.mxu0 0.0
    %72 = vmatprep.subr.mxu0 0.0
    %73 = vmatpush1.msra.mxu0 0.0
    %74 = vmatprep.subr.mxu0 0.0
    %75 = vmatpush1.msra.mxu0 0.0
    %76 = vmatprep.subr.mxu0 0.0
    %77 = vmatpush1.msra.mxu0 0.0
    %78 = vmatprep.subr.mxu0 0.0
    %79 = vmatpush1.msra.mxu0 0.0
    %80 = vmatprep.subr.mxu0 0.0
    %81 = vmatpush1.msra.mxu0 0.0
    %82 = vmatprep.subr.mxu0 0.0
    %83 = vmatpush1.msra.mxu0 0.0
    %84 = vmatprep.subr.mxu0 0.0
    %85 = vmatpush1.msra.mxu0 0.0
    %86 = vmatprep.subr.mxu0 0.0
    %87 = vmatpush1.msra.mxu0 0.0
    %88 = vmatprep.subr.mxu0 0.0
    %89 = vmatpush1.msra.mxu0 0.0
    %90 = vmatprep.subr.mxu0 0.0
    %91 = vmatpush1.msra.mxu0 0.0
    %92 = vmatprep.subr.mxu0 0.0
    %93 = vmatpush1.msra.mxu0 0.0
    %94 = vmatprep.subr.mxu0 0.0
    %95 = vmatpush1.msra.mxu0 0.0
    %96 = vmatprep.subr.mxu0 0.0
    %97 = vmatpush1.msra.mxu0 0.0
    %98 = vmatprep.subr.mxu0 0.0
    %99 = vmatpush1.msra.mxu0 0.0
    %100 = vmatprep.subr.mxu0 0.0
    %101 = vmatpush1.msra.mxu0 0.0
    %102 = vmatprep.mubr.f32.mxu0 0.0
    %103 = vmatmul.mubr.f32.gmra.mrb[0].mxu0 %v36
    %v104 = vpop.f32.mrb[0].mxu0
    %v105 = vadd.f32 %v33, %v104
    %v106 = vpop.f32.mrb[0].mxu0
    %107 = vdwg.mxu0
    %v108 = vtanh.pop %v105
    %v109 = vlaneseq
    %v110 = vshrl.u32 %v109, 7
    %v111 = vsub.s32 0, %v110
    %v112 = vrot.slane %v27, %v111
    %vm113 = vcmask 130048
    %v115 = vsel %vm113, %v108, 0
    %117 = vmatprep.subr.mxu0 0.0
    %118 = vmatpush1.msra.mxu0 %v16
    %119 = vmatprep.subr.mxu0 0.0
    %120 = vmatpush1.msra.mxu0 %v17
    %121 = vmatprep.subr.mxu0 0.0
    %122 = vmatpush1.msra.mxu0 0.0
    %123 = vmatprep.subr.mxu0 0.0
    %124 = vmatpush1.msra.mxu0 0.0
    %125 = vmatprep.subr.mxu0 0.0
    %126 = vmatpush1.msra.mxu0 0.0
    %127 = vmatprep.subr.mxu0 0.0
    %128 = vmatpush1.msra.mxu0 0.0
    %129 = vmatprep.subr.mxu0 0.0
    %130 = vmatpush1.msra.mxu0 0.0
    %131 = vmatprep.subr.mxu0 0.0
    %132 = vmatpush1.msra.mxu0 0.0
    %133 = vmatprep.subr.mxu0 0.0
    %134 = vmatpush1.msra.mxu0 0.0
    %135 = vmatprep.subr.mxu0 0.0
    %136 = vmatpush1.msra.mxu0 0.0
    %137 = vmatprep.subr.mxu0 0.0
    %138 = vmatpush1.msra.mxu0 0.0
    %139 = vmatprep.subr.mxu0 0.0
    %140 = vmatpush1.msra.mxu0 0.0
    %141 = vmatprep.subr.mxu0 0.0
    %142 = vmatpush1.msra.mxu0 0.0
    %143 = vmatprep.subr.mxu0 0.0
    %144 = vmatpush1.msra.mxu0 0.0
    %145 = vmatprep.subr.mxu0 0.0
    %146 = vmatpush1.msra.mxu0 0.0
    %147 = vmatprep.subr.mxu0 0.0
    %148 = vmatpush1.msra.mxu0 0.0
    %149 = vmatprep.subr.mxu0 0.0
    %150 = vmatpush1.msra.mxu0 0.0
    %151 = vmatprep.subr.mxu0 0.0
    %152 = vmatpush1.msra.mxu0 0.0
    %153 = vmatprep.subr.mxu0 0.0
    %154 = vmatpush1.msra.mxu0 0.0
    %155 = vmatprep.subr.mxu0 0.0
    %156 = vmatpush1.msra.mxu0 0.0
    %157 = vmatprep.subr.mxu0 0.0
    %158 = vmatpush1.msra.mxu0 0.0
    %159 = vmatprep.subr.mxu0 0.0
    %160 = vmatpush1.msra.mxu0 0.0
    %161 = vmatprep.subr.mxu0 0.0
    %162 = vmatpush1.msra.mxu0 0.0
    %163 = vmatprep.subr.mxu0 0.0
    %164 = vmatpush1.msra.mxu0 0.0
    %165 = vmatprep.subr.mxu0 0.0
    %166 = vmatpush1.msra.mxu0 0.0
    %167 = vmatprep.subr.mxu0 0.0
    %168 = vmatpush1.msra.mxu0 0.0
    %169 = vmatprep.subr.mxu0 0.0
    %170 = vmatpush1.msra.mxu0 0.0
    %171 = vmatprep.subr.mxu0 0.0
    %172 = vmatpush1.msra.mxu0 0.0
    %173 = vmatprep.subr.mxu0 0.0
    %174 = vmatpush1.msra.mxu0 0.0
    %175 = vmatprep.subr.mxu0 0.0
    %176 = vmatpush1.msra.mxu0 0.0
    %177 = vmatprep.subr.mxu0 0.0
    %178 = vmatpush1.msra.mxu0 0.0
    %179 = vmatprep.subr.mxu0 0.0
    %180 = vmatpush1.msra.mxu0 0.0
    %181 = vmatprep.mubr.f32.mxu0 0.0
    %182 = vmatmul.mubr.f32.gmra.mrb[0].mxu0 %v115
    %v183 = vpop.f32.mrb[0].mxu0
    %v184 = vadd.f32 %v112, %v183
    %v185 = vpop.f32.mrb[0].mxu0
    %186 = vdwg.mxu0
    %v187 = vtanh.pop %v184
    %v188 = vlaneseq
    %v189 = vshrl.u32 %v188, 7
    %v190 = vsub.s32 0, %v189
    %v191 = vrot.slane %v28, %v190
    %vm192 = vcmask 261120
    %v194 = vsel %vm192, %v187, 0
    %196 = vmatprep.subr.mxu0 0.0
    %197 = vmatpush1.msra.mxu0 %v18
    %198 = vmatprep.subr.mxu0 0.0
    %199 = vmatpush1.msra.mxu0 %v19
    %200 = vmatprep.subr.mxu0 0.0
    %201 = vmatpush1.msra.mxu0 %v20
    %202 = vmatprep.subr.mxu0 0.0
    %203 = vmatpush1.msra.mxu0 %v21
    %204 = vmatprep.subr.mxu0 0.0
    %205 = vmatpush1.msra.mxu0 0.0
    %206 = vmatprep.subr.mxu0 0.0
    %207 = vmatpush1.msra.mxu0 0.0
    %208 = vmatprep.subr.mxu0 0.0
    %209 = vmatpush1.msra.mxu0 0.0
    %210 = vmatprep.subr.mxu0 0.0
    %211 = vmatpush1.msra.mxu0 0.0
    %212 = vmatprep.subr.mxu0 0.0
    %213 = vmatpush1.msra.mxu0 0.0
    %214 = vmatprep.subr.mxu0 0.0
    %215 = vmatpush1.msra.mxu0 0.0
    %216 = vmatprep.subr.mxu0 0.0
    %217 = vmatpush1.msra.mxu0 0.0
    %218 = vmatprep.subr.mxu0 0.0
    %219 = vmatpush1.msra.mxu0 0.0
    %220 = vmatprep.subr.mxu0 0.0
    %221 = vmatpush1.msra.mxu0 0.0
    %222 = vmatprep.subr.mxu0 0.0
    %223 = vmatpush1.msra.mxu0 0.0
    %224 = vmatprep.subr.mxu0 0.0
    %225 = vmatpush1.msra.mxu0 0.0
    %226 = vmatprep.subr.mxu0 0.0
    %227 = vmatpush1.msra.mxu0 0.0
    %228 = vmatprep.subr.mxu0 0.0
    %229 = vmatpush1.msra.mxu0 0.0
    %230 = vmatprep.subr.mxu0 0.0
    %231 = vmatpush1.msra.mxu0 0.0
    %232 = vmatprep.subr.mxu0 0.0
    %233 = vmatpush1.msra.mxu0 0.0
    %234 = vmatprep.subr.mxu0 0.0
    %235 = vmatpush1.msra.mxu0 0.0
    %236 = vmatprep.subr.mxu0 0.0
    %237 = vmatpush1.msra.mxu0 0.0
    %238 = vmatprep.subr.mxu0 0.0
    %239 = vmatpush1.msra.mxu0 0.0
    %240 = vmatprep.subr.mxu0 0.0
    %241 = vmatpush1.msra.mxu0 0.0
    %242 = vmatprep.subr.mxu0 0.0
    %243 = vmatpush1.msra.mxu0 0.0
    %244 = vmatprep.subr.mxu0 0.0
    %245 = vmatpush1.msra.mxu0 0.0
    %246 = vmatprep.subr.mxu0 0.0
    %247 = vmatpush1.msra.mxu0 0.0
    %248 = vmatprep.subr.mxu0 0.0
    %249 = vmatpush1.msra.mxu0 0.0
    %250 = vmatprep.subr.mxu0 0.0
    %251 = vmatpush1.msra.mxu0 0.0
    %252 = vmatprep.subr.mxu0 0.0
    %253 = vmatpush1.msra.mxu0 0.0
    %254 = vmatprep.subr.mxu0 0.0
    %255 = vmatpush1.msra.mxu0 0.0
    %256 = vmatprep.subr.mxu0 0.0
    %257 = vmatpush1.msra.mxu0 0.0
    %258 = vmatprep.subr.mxu0 0.0
    %259 = vmatpush1.msra.mxu0 0.0
    %260 = vmatprep.mubr.f32.mxu0 0.0
    %261 = vmatmul.mubr.f32.gmra.mrb[0].mxu0 %v194
    %v262 = vpop.f32.mrb[0].mxu0
    %v263 = vadd.f32 %v191, %v262
    %v264 = vpop.f32.mrb[0].mxu0
    %265 = vdwg.mxu0
    %v266 = vlaneseq
    %v267 = vshrl.u32 %v266, 7
    %v268 = vsub.s32 0, %v267
    %v269 = vrot.slane %v29, %v268
    %270 = vmatprep.subr.mxu0 0.0
    %271 = vmatpush1.msra.mxu0 %v22
    %272 = vmatprep.subr.mxu0 0.0
    %273 = vmatpush1.msra.mxu0 %v23
    %274 = vmatprep.subr.mxu0 0.0
    %275 = vmatpush1.msra.mxu0 %v24
    %276 = vmatprep.subr.mxu0 0.0
    %277 = vmatpush1.msra.mxu0 %v25
    %278 = vmatprep.subr.mxu0 0.0
    %279 = vmatpush1.msra.mxu0 0.0
    %280 = vmatprep.subr.mxu0 0.0
    %281 = vmatpush1.msra.mxu0 0.0
    %282 = vmatprep.subr.mxu0 0.0
    %283 = vmatpush1.msra.mxu0 0.0
    %284 = vmatprep.subr.mxu0 0.0
    %285 = vmatpush1.msra.mxu0 0.0
    %286 = vmatprep.subr.mxu0 0.0
    %287 = vmatpush1.msra.mxu0 0.0
    %288 = vmatprep.subr.mxu0 0.0
    %289 = vmatpush1.msra.mxu0 0.0
    %290 = vmatprep.subr.mxu0 0.0
    %291 = vmatpush1.msra.mxu0 0.0
    %292 = vmatprep.subr.mxu0 0.0
    %293 = vmatpush1.msra.mxu0 0.0
    %294 = vmatprep.subr.mxu0 0.0
    %295 = vmatpush1.msra.mxu0 0.0
    %296 = vmatprep.subr.mxu0 0.0
    %297 = vmatpush1.msra.mxu0 0.0
    %298 = vmatprep.subr.mxu0 0.0
    %299 = vmatpush1.msra.mxu0 0.0
    %300 = vmatprep.subr.mxu0 0.0
    %301 = vmatpush1.msra.mxu0 0.0
    %302 = vmatprep.subr.mxu0 0.0
    %303 = vmatpush1.msra.mxu0 0.0
    %304 = vmatprep.subr.mxu0 0.0
    %305 = vmatpush1.msra.mxu0 0.0
    %306 = vmatprep.subr.mxu0 0.0
    %307 = vmatpush1.msra.mxu0 0.0
    %308 = vmatprep.subr.mxu0 0.0
    %309 = vmatpush1.msra.mxu0 0.0
    %310 = vmatprep.subr.mxu0 0.0
    %311 = vmatpush1.msra.mxu0 0.0
    %312 = vmatprep.subr.mxu0 0.0
    %313 = vmatpush1.msra.mxu0 0.0
    %314 = vmatprep.subr.mxu0 0.0
    %315 = vmatpush1.msra.mxu0 0.0
    %316 = vmatprep.subr.mxu0 0.0
    %317 = vmatpush1.msra.mxu0 0.0
    %318 = vmatprep.subr.mxu0 0.0
    %319 = vmatpush1.msra.mxu0 0.0
    %320 = vmatprep.subr.mxu0 0.0
    %321 = vmatpush1.msra.mxu0 0.0
    %322 = vmatprep.subr.mxu0 0.0
    %323 = vmatpush1.msra.mxu0 0.0
    %324 = vmatprep.subr.mxu0 0.0
    %325 = vmatpush1.msra.mxu0 0.0
    %326 = vmatprep.subr.mxu0 0.0
    %327 = vmatpush1.msra.mxu0 0.0
    %328 = vmatprep.subr.mxu0 0.0
    %329 = vmatpush1.msra.mxu0 0.0
    %330 = vmatprep.subr.mxu0 0.0
    %331 = vmatpush1.msra.mxu0 0.0
    %332 = vmatprep.subr.mxu0 0.0
    %333 = vmatpush1.msra.mxu0 0.0
    %334 = vmatprep.mubr.f32.mxu0 0.0
    %335 = vmatmul.mubr.f32.gmra.mrb[0].mxu0 %v194
    %v336 = vpop.f32.mrb[0].mxu0
    %v337 = vadd.f32 %v269, %v336
    %v338 = vpop.f32.mrb[0].mxu0
    %339 = vdwg.mxu0
    %340 = vst.msk [vmem:[#allocation2] sm:$0xff] %vm113, %v263
    %v341 = vmul.f32 %v337, 1.442695
    %v342 = vpow.pop %v341
    %343 = vst.msk [vmem:[%s3] sm:$0xff] %vm113, %v342
    // Predicated region
    $region10: #{gaussian_decoder.1} parent=1 // pred_check
      _
    $region11: #{gaussian_decoder.1} parent=1 // pred_check_branch
      %345 = sbr.rel (0) target = $region13
    $region12: #{gaussian_decoder.1} parent=1 // pred_region
      %s347 = ssub.s32 128, 128
      %348 = vsyncadd [#allocation3], %s347
      %s350 = sshll.u32 [#allocation2], 4
      %s351 = int_to_ptr.vmem [resolvable:$true] %s350
      %353 = dma.vmem_to_hbm [thread:$0]  %s351, 128, %s2, [#allocation3]
    $region13: #{gaussian_decoder.1} parent=1 // pred_fallthru
      _
    // Predicated region
    $region14: #{gaussian_decoder.1} parent=1 // pred_check
      _
    $region15: #{gaussian_decoder.1} parent=1 // pred_check_branch
      %355 = sbr.rel (0) target = $region17
    $region16: #{gaussian_decoder.1} parent=1 // pred_region
      _
    $region17: #{gaussian_decoder.1} parent=1 // pred_fallthru
      _
    // Predicated region
    $region18: #{gaussian_decoder.1} parent=1 // pred_check
      _
    $region19: #{gaussian_decoder.1} parent=1 // pred_check_branch
      %357 = sbr.rel (0) target = $region21
    $region20: #{gaussian_decoder.1} parent=1 // pred_region
      %358 = dma.done [#allocation3], 128
    $region21: #{gaussian_decoder.1} parent=1 // pred_fallthru
      _
    // Predicated region
    $region22: #{gaussian_decoder.1} parent=1 // pred_check
      _
    $region23: #{gaussian_decoder.1} parent=1 // pred_check_branch
      %360 = sbr.rel (0) target = $region25
    $region24: #{gaussian_decoder.1} parent=1 // pred_region
      _
    $region25: #{gaussian_decoder.1} parent=1 // pred_fallthru
      _
    %361 = vsyncpa [#allocation3], 1

</llo_original>
